<compile_context>
chip_gen: v7x
topology: tpu7x:2x2x1
jax: 0.10.0
libtpu: 0.0.40
codegen_flags: <defaults>
</compile_context>

<pallas_src>
import functools
import math

import jax
import jax.numpy as jnp
from jax.experimental import pallas as pl
from jax.experimental.pallas import tpu as pltpu


def get_alibi_slopes(num_heads):
    x = (2 ** 8) ** (1.0 / num_heads)
    return jnp.array([1.0 / x ** (i + 1) for i in range(num_heads)], dtype=jnp.float32)


def alibi_mha_kernel(bias_ref, x_ref, w_ref, b_ref, o_ref, k_cache, v_cache,
                     *, num_heads, head_dim, compute_dtype):
    """One grid step = (batch b, query-tile qi); qi is the sequential inner axis.

    bias_ref : (H, S)     f32  VMEM  precomputed slope_h * j (ALiBi column term)
    x_ref    : (1, S, D)  cdt  VMEM  full sequence of x for batch b
    w_ref    : (3, D, D)  cdt  VMEM  pre-transposed [q, k, v] projection weights
    b_ref    : (3, 1, D)  f32  VMEM  [q, k, v] projection biases
    o_ref    : (1, TQ, D) f32  VMEM  output block for this query tile
    k_cache  : (S, D)     cdt  VMEM  persistent per-batch K cache
    v_cache  : (S, D)     cdt  VMEM  persistent per-batch V cache
    """
    TQ = o_ref.shape[1]
    dh = head_dim
    qi = pl.program_id(1)

    # K/V projection once per batch (qi is the innermost, sequential grid axis),
    # full-width (S, D) @ (D, D) matmuls -> persistent caches.
    @pl.when(qi == 0)
    def _():
        x_all = x_ref[0]                                                    # (S, D)
        k = jnp.dot(x_all, w_ref[1], preferred_element_type=jnp.float32) + b_ref[1]
        v = jnp.dot(x_all, w_ref[2], preferred_element_type=jnp.float32) + b_ref[2]
        k_cache[...] = k.astype(compute_dtype)
        v_cache[...] = v.astype(compute_dtype)

    # Query rows sliced from the resident full-sequence block (no separate input).
    q_start = pl.multiple_of(qi * TQ, TQ)
    x_q = x_ref[0, pl.ds(q_start, TQ), :]                                   # (TQ, D)
    # 1/sqrt(d_model) is already folded into w_ref[0] / b_ref[0] by the wrapper.
    q = (jnp.dot(x_q, w_ref[0], preferred_element_type=jnp.float32)
         + b_ref[0]).astype(compute_dtype)                                  # (TQ, D)

    # num_heads is small & static -> unrolled loop.
    # TODO(synk): for num_heads >~ 8 move heads to a grid axis / fori_loop to
    # bound vreg live ranges ((TQ, S) score per head).
    for h in range(num_heads):
        lo = h * dh
        q_h = q[:, lo:lo + dh]                                              # (TQ, dh)
        k_h = k_cache[:, lo:lo + dh]                                        # (S, dh)
        v_h = v_cache[:, lo:lo + dh]                                        # (S, dh)

        # q_h @ k_h.T via dot_general (contract last dims) -- no transpose.
        score = jax.lax.dot_general(
            q_h, k_h, dimension_numbers=(((1,), (1,)), ((), ())),
            preferred_element_type=jnp.float32)                             # (TQ, S)
        score = score + bias_ref[h:h + 1, :]                                # ALiBi column term

        # Softmax over keys in f32; normalize AFTER the PV matmul (TQ x dh mul).
        score = score - jnp.max(score, axis=-1, keepdims=True)
        p = jnp.exp(score)
        denom = jnp.sum(p, axis=-1, keepdims=True)                          # (TQ, 1)
        out_h = jnp.dot(p.astype(compute_dtype), v_h,
                        preferred_element_type=jnp.float32)                 # (TQ, dh)
        out_h = out_h * pl.reciprocal(denom, approx=True)
        # TODO(synk): if dh < 128 in production, concatenate heads to a >=128-lane
        # chunk before storing to avoid masked vst (v5e has one vector-store slot).
        o_ref[0, :, lo:lo + dh] = out_h.astype(o_ref.dtype)


def alibi_mha_forward(x, w_kqv, b_kqv, slopes, num_heads, *, q_tile=None,
                      compute_dtype=jnp.bfloat16):
    """Returns a 1-tuple (out,) matching the PyTorch module's forward()."""
    B, S, D = x.shape
    assert D % num_heads == 0
    dh = D // num_heads
    if q_tile is None:
        # v5e: 128 matches the MXU; v6e/v7x prefer 256 to fill the 256-wide MXU.
        q_tile = S if S <= 256 else 256
    assert S % q_tile == 0, "seq_len must be divisible by q_tile"
    num_q_tiles = S // q_tile
    inv_scale = 1.0 / math.sqrt(D)   # module scales by sqrt(d_model), not sqrt(head_dim)

    # torch Linear: y = x @ W.T + b with W (3D, D); .chunk(3) order is key, query, value.
    w_k, w_q, w_v = w_kqv[:D], w_kqv[D:2 * D], w_kqv[2 * D:]
    b_k, b_q, b_v = b_kqv[:D], b_kqv[D:2 * D], b_kqv[2 * D:]

    # Pre-transposed full-width weights in kernel order [q, k, v]; fold the
    # 1/sqrt(d_model) scale into the q projection (one-time, free).
    w_packed = jnp.stack([w_q.T * inv_scale, w_k.T, w_v.T]).astype(compute_dtype)      # (3, D, D)
    b_packed = jnp.stack([b_q * inv_scale, b_k, b_v])[:, None, :].astype(jnp.float32)  # (3, 1, D)

    # ALiBi bias reduced to its column term slope*j; the row term slope*(-i) is a
    # per-row constant that cancels in softmax (valid: no attention mask here).
    bias_alibi = (slopes.astype(jnp.float32)[:, None]
                  * jnp.arange(S, dtype=jnp.float32)[None, :])                         # (H, S)

    x_c = x.astype(compute_dtype)

    kernel = functools.partial(alibi_mha_kernel, num_heads=num_heads,
                               head_dim=dh, compute_dtype=compute_dtype)

    # TODO(synk): for large d_model / long S on v7x (64 MiB VMEM), mark the
    # grid-invariant weight/bias/bias_alibi specs pipeline_mode=pl.Buffered(1) (or
    # keep weights in HBM via memory_space=pl.ANY) and add a KV grid axis with
    # online softmax so the (S, D) caches and (TQ, S) scores stop scaling with S.
    # TODO(synk): dropout with p=0.0 is an identity; training dropout not implemented.
    out = pl.pallas_call(
        kernel,
        out_shape=jax.ShapeDtypeStruct((B, S, D), jnp.float32),
        grid=(B, num_q_tiles),
        in_specs=[
            pl.BlockSpec((num_heads, S), lambda b, qi: (0, 0)),        # ALiBi column bias
            pl.BlockSpec((1, S, D), lambda b, qi: (b, 0, 0)),          # x full sequence
            pl.BlockSpec((3, D, D), lambda b, qi: (0, 0, 0)),          # packed weights
            pl.BlockSpec((3, 1, D), lambda b, qi: (0, 0, 0)),          # packed biases
        ],
        out_specs=pl.BlockSpec((1, q_tile, D), lambda b, qi: (b, qi, 0)),
        scratch_shapes=[pltpu.VMEM((S, D), compute_dtype),             # K cache (per batch)
                        pltpu.VMEM((S, D), compute_dtype)],            # V cache (per batch)
        compiler_params=pltpu.CompilerParams(
            # batch "parallel" (megacore / 2-TC v7x); qi must be sequential
            # ("arbitrary") so the per-batch K/V caches computed at qi==0 are reused.
            dimension_semantics=("parallel", "arbitrary"),
            vmem_limit_bytes=48 * 1024 * 1024),
    )(bias_alibi, x_c, w_packed, b_packed)
    return (out,)


def alibi_mha_reference(x, w_kqv, b_kqv, slopes, num_heads):
    """Pure-JAX f32 reference mirroring the PyTorch module exactly."""
    B, S, D = x.shape
    dh = D // num_heads
    scale = math.sqrt(D)
    kqv = jnp.einsum("bsd,ed->bse", x, w_kqv) + b_kqv                 # (B,S,3D)
    key, query, value = kqv[..., :D], kqv[..., D:2 * D], kqv[..., 2 * D:]
    key = key.reshape(B, S, num_heads, dh).transpose(0, 2, 3, 1)      # (B,H,dh,S)
    query = query.reshape(B, S, num_heads, dh).transpose(0, 2, 1, 3)  # (B,H,S,dh)
    value = value.reshape(B, S, num_heads, dh).transpose(0, 2, 1, 3)  # (B,H,S,dh)
    rel = jnp.arange(S)[None, :] - jnp.arange(S)[:, None]             # (S,S)
    bias = slopes[:, None, None] * rel[None, :, :]                    # (H,S,S)
    score = jnp.einsum("bhsd,bhdn->bhsn", query, key) / scale + bias[None]
    attn = jax.nn.softmax(score, axis=-1)
    out = jnp.einsum("bhsn,bhnd->bhsd", attn, value)
    return out.transpose(0, 2, 1, 3).reshape(B, S, D)


if __name__ == "__main__":
    B, S, D, H = 2, 16, 32, 4

    key0 = jax.random.PRNGKey(0)
    k_x, k_w, k_b = jax.random.split(key0, 3)

    # Deterministic synthetic parameters (torch.nn.Linear(d_model, 3*d_model) shapes).
    x = jax.random.normal(k_x, (B, S, D), dtype=jnp.float32)
    bound = 1.0 / math.sqrt(D)
    w_kqv = jax.random.uniform(k_w, (3 * D, D), dtype=jnp.float32, minval=-bound, maxval=bound)
    b_kqv = jax.random.uniform(k_b, (3 * D,), dtype=jnp.float32, minval=-bound, maxval=bound)
    slopes = get_alibi_slopes(H)

    # q_tile=8 -> grid (B, 2): exercises both the qi==0 K/V-projection path and the
    # cache-reuse path for qi > 0.
    (out,) = alibi_mha_forward(x, w_kqv, b_kqv, slopes, H, q_tile=8)
    out = jax.block_until_ready(out)

    ref = alibi_mha_reference(x, w_kqv, b_kqv, slopes, H)
    assert out.shape == (B, S, D)
    # bf16 MXU inputs + approx-reciprocal softmax -> compare to the f32 reference loosely.
    assert jnp.allclose(out, ref, atol=5e-2, rtol=5e-2), (
        f"Pallas output mismatch vs reference; max|diff|={jnp.max(jnp.abs(out - ref))}")

    print("KERNEL_OK")
</pallas_src>

<mosaic_0001>
module attributes {stable_mosaic.version = 11 : i64} {
  func.func @alibi_mha_kernel(%arg0: i32, %arg1: i32, %arg2: memref<4x16xf32, #tpu.memory_space<vmem>>, %arg3: memref<1x16x32xbf16, #tpu.memory_space<vmem>>, %arg4: memref<3x32x32xbf16, #tpu.memory_space<vmem>>, %arg5: memref<3x1x32xf32, #tpu.memory_space<vmem>>, %arg6: memref<1x8x32xf32, #tpu.memory_space<vmem>>, %arg7: memref<16x32xbf16, #tpu.memory_space<vmem>>, %arg8: memref<16x32xbf16, #tpu.memory_space<vmem>>) attributes {dimension_semantics = [#tpu.dimension_semantics<parallel>, #tpu.dimension_semantics<arbitrary>], iteration_bounds = array<i64: 2, 2>, scalar_prefetch = 0 : i64, scratch_operands = 2 : i64, tpu.core_type = #tpu.core_type<tc>, window_params = [{pipeline_mode = #tpu.pipeline_mode<synchronous>, transform_indices = @transform_0, window_bounds = array<i64: 4, 16>}, {transform_indices = @transform_1, window_bounds = array<i64: 1, 16, 32>}, {pipeline_mode = #tpu.pipeline_mode<synchronous>, transform_indices = @transform_2, window_bounds = array<i64: 3, 32, 32>}, {pipeline_mode = #tpu.pipeline_mode<synchronous>, transform_indices = @transform_3, window_bounds = array<i64: 3, 1, 32>}, {transform_indices = @transform_4, window_bounds = array<i64: 1, 8, 32>}]} {
    %c0_i32 = arith.constant 0 : i32
    %0 = arith.cmpi eq, %arg1, %c0_i32 : i32
    %1 = arith.extui %0 : i1 to i32
    %c0_i32_0 = arith.constant 0 : i32
    %2 = arith.cmpi ne, %1, %c0_i32_0 : i32
    scf.if %2 {
      %c0_54 = arith.constant 0 : index
      %c0_55 = arith.constant 0 : index
      %c0_56 = arith.constant 0 : index
      %104 = vector.load %arg3[%c0_54, %c0_55, %c0_56] : memref<1x16x32xbf16, #tpu.memory_space<vmem>>, vector<1x16x32xbf16>
      %105 = vector.shape_cast %104 : vector<1x16x32xbf16> to vector<16x32xbf16>
      %c1_57 = arith.constant 1 : index
      %c0_58 = arith.constant 0 : index
      %c0_59 = arith.constant 0 : index
      %106 = vector.load %arg4[%c1_57, %c0_58, %c0_59] : memref<3x32x32xbf16, #tpu.memory_space<vmem>>, vector<1x32x32xbf16>
      %107 = vector.shape_cast %106 : vector<1x32x32xbf16> to vector<32x32xbf16>
      %cst_60 = arith.constant dense<0.000000e+00> : vector<16x32xf32>
      %108 = tpu.matmul %105, %107, %cst_60 {dimension_numbers = #tpu.dot_dimension_numbers<[1], [0], [0], [1], [0, 0, 1, 1], [], []>} : vector<16x32xbf16>, vector<32x32xbf16>, vector<16x32xf32> -> vector<16x32xf32>
      %c1_61 = arith.constant 1 : index
      %c0_62 = arith.constant 0 : index
      %c0_63 = arith.constant 0 : index
      %109 = vector.load %arg5[%c1_61, %c0_62, %c0_63] : memref<3x1x32xf32, #tpu.memory_space<vmem>>, vector<1x1x32xf32>
      %110 = vector.shape_cast %109 : vector<1x1x32xf32> to vector<1x32xf32>
      %111 = vector.broadcast %110 : vector<1x32xf32> to vector<16x32xf32>
      %112 = arith.addf %108, %111 : vector<16x32xf32>
      %c2_64 = arith.constant 2 : index
      %c0_65 = arith.constant 0 : index
      %c0_66 = arith.constant 0 : index
      %113 = vector.load %arg4[%c2_64, %c0_65, %c0_66] : memref<3x32x32xbf16, #tpu.memory_space<vmem>>, vector<1x32x32xbf16>
      %114 = vector.shape_cast %113 : vector<1x32x32xbf16> to vector<32x32xbf16>
      %cst_67 = arith.constant dense<0.000000e+00> : vector<16x32xf32>
      %115 = tpu.matmul %105, %114, %cst_67 {dimension_numbers = #tpu.dot_dimension_numbers<[1], [0], [0], [1], [0, 0, 1, 1], [], []>} : vector<16x32xbf16>, vector<32x32xbf16>, vector<16x32xf32> -> vector<16x32xf32>
      %c2_68 = arith.constant 2 : index
      %c0_69 = arith.constant 0 : index
      %c0_70 = arith.constant 0 : index
      %116 = vector.load %arg5[%c2_68, %c0_69, %c0_70] : memref<3x1x32xf32, #tpu.memory_space<vmem>>, vector<1x1x32xf32>
      %117 = vector.shape_cast %116 : vector<1x1x32xf32> to vector<1x32xf32>
      %118 = vector.broadcast %117 : vector<1x32xf32> to vector<16x32xf32>
      %119 = arith.addf %115, %118 : vector<16x32xf32>
      %120 = arith.truncf %112 : vector<16x32xf32> to vector<16x32xbf16>
      %c0_71 = arith.constant 0 : index
      %c0_72 = arith.constant 0 : index
      %121 = vector.load %arg7[%c0_71, %c0_72] : memref<16x32xbf16, #tpu.memory_space<vmem>>, vector<16x32xbf16>
      tpu.vector_store %arg7[%c0_71, %c0_72], %120 {strides = array<i32>} : memref<16x32xbf16, #tpu.memory_space<vmem>>, vector<16x32xbf16>,
      %122 = arith.truncf %119 : vector<16x32xf32> to vector<16x32xbf16>
      %c0_73 = arith.constant 0 : index
      %c0_74 = arith.constant 0 : index
      %123 = vector.load %arg8[%c0_73, %c0_74] : memref<16x32xbf16, #tpu.memory_space<vmem>>, vector<16x32xbf16>
      tpu.vector_store %arg8[%c0_73, %c0_74], %122 {strides = array<i32>} : memref<16x32xbf16, #tpu.memory_space<vmem>>, vector<16x32xbf16>,
    } else {
    }
    %c8_i32 = arith.constant 8 : i32
    %3 = arith.muli %arg1, %c8_i32 : i32
    %4 = tpu.assume_multiple %3, 8 : i32
    %c0 = arith.constant 0 : index
    %5 = arith.index_cast %4 : i32 to index
    %c0_1 = arith.constant 0 : index
    %6 = vector.load %arg3[%c0, %5, %c0_1] : memref<1x16x32xbf16, #tpu.memory_space<vmem>>, vector<1x8x32xbf16>
    %7 = vector.shape_cast %6 : vector<1x8x32xbf16> to vector<8x32xbf16>
    %c0_2 = arith.constant 0 : index
    %c0_3 = arith.constant 0 : index
    %c0_4 = arith.constant 0 : index
    %8 = vector.load %arg4[%c0_2, %c0_3, %c0_4] : memref<3x32x32xbf16, #tpu.memory_space<vmem>>, vector<1x32x32xbf16>
    %9 = vector.shape_cast %8 : vector<1x32x32xbf16> to vector<32x32xbf16>
    %cst = arith.constant dense<0.000000e+00> : vector<8x32xf32>
    %10 = tpu.matmul %7, %9, %cst {dimension_numbers = #tpu.dot_dimension_numbers<[1], [0], [0], [1], [0, 0, 1, 1], [], []>} : vector<8x32xbf16>, vector<32x32xbf16>, vector<8x32xf32> -> vector<8x32xf32>
    %c0_5 = arith.constant 0 : index
    %c0_6 = arith.constant 0 : index
    %c0_7 = arith.constant 0 : index
    %11 = vector.load %arg5[%c0_5, %c0_6, %c0_7] : memref<3x1x32xf32, #tpu.memory_space<vmem>>, vector<1x1x32xf32>
    %12 = vector.shape_cast %11 : vector<1x1x32xf32> to vector<1x32xf32>
    %13 = vector.broadcast %12 : vector<1x32xf32> to vector<8x32xf32>
    %14 = arith.addf %10, %13 : vector<8x32xf32>
    %15 = arith.truncf %14 : vector<8x32xf32> to vector<8x32xbf16>
    %16 = vector.extract_strided_slice %15 {offsets = [0, 0], sizes = [8, 8], strides = [1, 1]} : vector<8x32xbf16> to vector<8x8xbf16>
    %c0_8 = arith.constant 0 : index
    %c0_9 = arith.constant 0 : index
    %17 = vector.load %arg7[%c0_8, %c0_9] : memref<16x32xbf16, #tpu.memory_space<vmem>>, vector<16x8xbf16>
    %c0_10 = arith.constant 0 : index
    %c0_11 = arith.constant 0 : index
    %18 = vector.load %arg8[%c0_10, %c0_11] : memref<16x32xbf16, #tpu.memory_space<vmem>>, vector<16x8xbf16>
    %cst_12 = arith.constant dense<0.000000e+00> : vector<8x16xf32>
    %19 = tpu.matmul %16, %17, %cst_12 {dimension_numbers = #tpu.dot_dimension_numbers<[1], [1], [0], [0], [0, 0, 1, 0], [], []>} : vector<8x8xbf16>, vector<16x8xbf16>, vector<8x16xf32> -> vector<8x16xf32>
    %c0_13 = arith.constant 0 : index
    %c0_14 = arith.constant 0 : index
    %20 = vector.load %arg2[%c0_13, %c0_14] : memref<4x16xf32, #tpu.memory_space<vmem>>, vector<1x16xf32>
    %21 = vector.broadcast %20 : vector<1x16xf32> to vector<8x16xf32>
    %22 = arith.addf %19, %21 : vector<8x16xf32>
    %cst_15 = arith.constant dense<0xFF800000> : vector<8xf32>
    %23 = vector.multi_reduction <maximumf>, %22, %cst_15 [1] : vector<8x16xf32> to vector<8xf32>
    %24 = vector.shape_cast %23 : vector<8xf32> to vector<8x1xf32>
    %25 = vector.broadcast %24 : vector<8x1xf32> to vector<8x16xf32>
    %26 = arith.subf %22, %25 : vector<8x16xf32>
    %27 = math.exp %26 : vector<8x16xf32>
    %cst_16 = arith.constant dense<0.000000e+00> : vector<8xf32>
    %28 = vector.multi_reduction <add>, %27, %cst_16 [1] : vector<8x16xf32> to vector<8xf32>
    %29 = vector.shape_cast %28 : vector<8xf32> to vector<8x1xf32>
    %30 = arith.truncf %27 : vector<8x16xf32> to vector<8x16xbf16>
    %cst_17 = arith.constant dense<0.000000e+00> : vector<8x8xf32>
    %31 = tpu.matmul %30, %18, %cst_17 {dimension_numbers = #tpu.dot_dimension_numbers<[1], [0], [0], [1], [0, 0, 1, 1], [], []>} : vector<8x16xbf16>, vector<16x8xbf16>, vector<8x8xf32> -> vector<8x8xf32>
    %32 = tpu.reciprocal %29 {approx = true} : vector<8x1xf32> -> vector<8x1xf32>
    %33 = vector.broadcast %32 : vector<8x1xf32> to vector<8x8xf32>
    %34 = arith.mulf %31, %33 : vector<8x8xf32>
    %c0_18 = arith.constant 0 : index
    %c0_19 = arith.constant 0 : index
    %c0_20 = arith.constant 0 : index
    %35 = vector.load %arg6[%c0_18, %c0_19, %c0_20] : memref<1x8x32xf32, #tpu.memory_space<vmem>>, vector<1x8x8xf32>
    %36 = vector.shape_cast %35 : vector<1x8x8xf32> to vector<8x8xf32>
    %37 = vector.shape_cast %34 : vector<8x8xf32> to vector<1x8x8xf32>
    tpu.vector_store %arg6[%c0_18, %c0_19, %c0_20], %37 {strides = array<i32>} : memref<1x8x32xf32, #tpu.memory_space<vmem>>, vector<1x8x8xf32>,
    %38 = vector.extract_strided_slice %15 {offsets = [0, 8], sizes = [8, 8], strides = [1, 1]} : vector<8x32xbf16> to vector<8x8xbf16>
    %c0_21 = arith.constant 0 : index
    %c8 = arith.constant 8 : index
    %39 = vector.load %arg7[%c0_21, %c8] : memref<16x32xbf16, #tpu.memory_space<vmem>>, vector<16x8xbf16>
    %c0_22 = arith.constant 0 : index
    %c8_23 = arith.constant 8 : index
    %40 = vector.load %arg8[%c0_22, %c8_23] : memref<16x32xbf16, #tpu.memory_space<vmem>>, vector<16x8xbf16>
    %cst_24 = arith.constant dense<0.000000e+00> : vector<8x16xf32>
    %41 = tpu.matmul %38, %39, %cst_24 {dimension_numbers = #tpu.dot_dimension_numbers<[1], [1], [0], [0], [0, 0, 1, 0], [], []>} : vector<8x8xbf16>, vector<16x8xbf16>, vector<8x16xf32> -> vector<8x16xf32>
    %c1 = arith.constant 1 : index
    %c0_25 = arith.constant 0 : index
    %42 = vector.load %arg2[%c1, %c0_25] : memref<4x16xf32, #tpu.memory_space<vmem>>, vector<1x16xf32>
    %43 = vector.broadcast %42 : vector<1x16xf32> to vector<8x16xf32>
    %44 = arith.addf %41, %43 : vector<8x16xf32>
    %cst_26 = arith.constant dense<0xFF800000> : vector<8xf32>
    %45 = vector.multi_reduction <maximumf>, %44, %cst_26 [1] : vector<8x16xf32> to vector<8xf32>
    %46 = vector.shape_cast %45 : vector<8xf32> to vector<8x1xf32>
    %47 = vector.broadcast %46 : vector<8x1xf32> to vector<8x16xf32>
    %48 = arith.subf %44, %47 : vector<8x16xf32>
    %49 = math.exp %48 : vector<8x16xf32>
    %cst_27 = arith.constant dense<0.000000e+00> : vector<8xf32>
    %50 = vector.multi_reduction <add>, %49, %cst_27 [1] : vector<8x16xf32> to vector<8xf32>
    %51 = vector.shape_cast %50 : vector<8xf32> to vector<8x1xf32>
    %52 = arith.truncf %49 : vector<8x16xf32> to vector<8x16xbf16>
    %cst_28 = arith.constant dense<0.000000e+00> : vector<8x8xf32>
    %53 = tpu.matmul %52, %40, %cst_28 {dimension_numbers = #tpu.dot_dimension_numbers<[1], [0], [0], [1], [0, 0, 1, 1], [], []>} : vector<8x16xbf16>, vector<16x8xbf16>, vector<8x8xf32> -> vector<8x8xf32>
    %54 = tpu.reciprocal %51 {approx = true} : vector<8x1xf32> -> vector<8x1xf32>
    %55 = vector.broadcast %54 : vector<8x1xf32> to vector<8x8xf32>
    %56 = arith.mulf %53, %55 : vector<8x8xf32>
    %c0_29 = arith.constant 0 : index
    %c0_30 = arith.constant 0 : index
    %c8_31 = arith.constant 8 : index
    %57 = vector.load %arg6[%c0_29, %c0_30, %c8_31] : memref<1x8x32xf32, #tpu.memory_space<vmem>>, vector<1x8x8xf32>
    %58 = vector.shape_cast %57 : vector<1x8x8xf32> to vector<8x8xf32>
    %59 = vector.shape_cast %56 : vector<8x8xf32> to vector<1x8x8xf32>
    tpu.vector_store %arg6[%c0_29, %c0_30, %c8_31], %59 {strides = array<i32>} : memref<1x8x32xf32, #tpu.memory_space<vmem>>, vector<1x8x8xf32>,
    %60 = vector.extract_strided_slice %15 {offsets = [0, 16], sizes = [8, 8], strides = [1, 1]} : vector<8x32xbf16> to vector<8x8xbf16>
    %c0_32 = arith.constant 0 : index
    %c16 = arith.constant 16 : index
    %61 = vector.load %arg7[%c0_32, %c16] : memref<16x32xbf16, #tpu.memory_space<vmem>>, vector<16x8xbf16>
    %c0_33 = arith.constant 0 : index
    %c16_34 = arith.constant 16 : index
    %62 = vector.load %arg8[%c0_33, %c16_34] : memref<16x32xbf16, #tpu.memory_space<vmem>>, vector<16x8xbf16>
    %cst_35 = arith.constant dense<0.000000e+00> : vector<8x16xf32>
    %63 = tpu.matmul %60, %61, %cst_35 {dimension_numbers = #tpu.dot_dimension_numbers<[1], [1], [0], [0], [0, 0, 1, 0], [], []>} : vector<8x8xbf16>, vector<16x8xbf16>, vector<8x16xf32> -> vector<8x16xf32>
    %c2 = arith.constant 2 : index
    %c0_36 = arith.constant 0 : index
    %64 = vector.load %arg2[%c2, %c0_36] : memref<4x16xf32, #tpu.memory_space<vmem>>, vector<1x16xf32>
    %65 = vector.broadcast %64 : vector<1x16xf32> to vector<8x16xf32>
    %66 = arith.addf %63, %65 : vector<8x16xf32>
    %cst_37 = arith.constant dense<0xFF800000> : vector<8xf32>
    %67 = vector.multi_reduction <maximumf>, %66, %cst_37 [1] : vector<8x16xf32> to vector<8xf32>
    %68 = vector.shape_cast %67 : vector<8xf32> to vector<8x1xf32>
    %69 = vector.broadcast %68 : vector<8x1xf32> to vector<8x16xf32>
    %70 = arith.subf %66, %69 : vector<8x16xf32>
    %71 = math.exp %70 : vector<8x16xf32>
    %cst_38 = arith.constant dense<0.000000e+00> : vector<8xf32>
    %72 = vector.multi_reduction <add>, %71, %cst_38 [1] : vector<8x16xf32> to vector<8xf32>
    %73 = vector.shape_cast %72 : vector<8xf32> to vector<8x1xf32>
    %74 = arith.truncf %71 : vector<8x16xf32> to vector<8x16xbf16>
    %cst_39 = arith.constant dense<0.000000e+00> : vector<8x8xf32>
    %75 = tpu.matmul %74, %62, %cst_39 {dimension_numbers = #tpu.dot_dimension_numbers<[1], [0], [0], [1], [0, 0, 1, 1], [], []>} : vector<8x16xbf16>, vector<16x8xbf16>, vector<8x8xf32> -> vector<8x8xf32>
    %76 = tpu.reciprocal %73 {approx = true} : vector<8x1xf32> -> vector<8x1xf32>
    %77 = vector.broadcast %76 : vector<8x1xf32> to vector<8x8xf32>
    %78 = arith.mulf %75, %77 : vector<8x8xf32>
    %c0_40 = arith.constant 0 : index
    %c0_41 = arith.constant 0 : index
    %c16_42 = arith.constant 16 : index
    %79 = vector.load %arg6[%c0_40, %c0_41, %c16_42] : memref<1x8x32xf32, #tpu.memory_space<vmem>>, vector<1x8x8xf32>
    %80 = vector.shape_cast %79 : vector<1x8x8xf32> to vector<8x8xf32>
    %81 = vector.shape_cast %78 : vector<8x8xf32> to vector<1x8x8xf32>
    tpu.vector_store %arg6[%c0_40, %c0_41, %c16_42], %81 {strides = array<i32>} : memref<1x8x32xf32, #tpu.memory_space<vmem>>, vector<1x8x8xf32>,
    %82 = vector.extract_strided_slice %15 {offsets = [0, 24], sizes = [8, 8], strides = [1, 1]} : vector<8x32xbf16> to vector<8x8xbf16>
    %c0_43 = arith.constant 0 : index
    %c24 = arith.constant 24 : index
    %83 = vector.load %arg7[%c0_43, %c24] : memref<16x32xbf16, #tpu.memory_space<vmem>>, vector<16x8xbf16>
    %c0_44 = arith.constant 0 : index
    %c24_45 = arith.constant 24 : index
    %84 = vector.load %arg8[%c0_44, %c24_45] : memref<16x32xbf16, #tpu.memory_space<vmem>>, vector<16x8xbf16>
    %cst_46 = arith.constant dense<0.000000e+00> : vector<8x16xf32>
    %85 = tpu.matmul %82, %83, %cst_46 {dimension_numbers = #tpu.dot_dimension_numbers<[1], [1], [0], [0], [0, 0, 1, 0], [], []>} : vector<8x8xbf16>, vector<16x8xbf16>, vector<8x16xf32> -> vector<8x16xf32>
    %c3 = arith.constant 3 : index
    %c0_47 = arith.constant 0 : index
    %86 = vector.load %arg2[%c3, %c0_47] : memref<4x16xf32, #tpu.memory_space<vmem>>, vector<1x16xf32>
    %87 = vector.broadcast %86 : vector<1x16xf32> to vector<8x16xf32>
    %88 = arith.addf %85, %87 : vector<8x16xf32>
    %cst_48 = arith.constant dense<0xFF800000> : vector<8xf32>
    %89 = vector.multi_reduction <maximumf>, %88, %cst_48 [1] : vector<8x16xf32> to vector<8xf32>
    %90 = vector.shape_cast %89 : vector<8xf32> to vector<8x1xf32>
    %91 = vector.broadcast %90 : vector<8x1xf32> to vector<8x16xf32>
    %92 = arith.subf %88, %91 : vector<8x16xf32>
    %93 = math.exp %92 : vector<8x16xf32>
    %cst_49 = arith.constant dense<0.000000e+00> : vector<8xf32>
    %94 = vector.multi_reduction <add>, %93, %cst_49 [1] : vector<8x16xf32> to vector<8xf32>
    %95 = vector.shape_cast %94 : vector<8xf32> to vector<8x1xf32>
    %96 = arith.truncf %93 : vector<8x16xf32> to vector<8x16xbf16>
    %cst_50 = arith.constant dense<0.000000e+00> : vector<8x8xf32>
    %97 = tpu.matmul %96, %84, %cst_50 {dimension_numbers = #tpu.dot_dimension_numbers<[1], [0], [0], [1], [0, 0, 1, 1], [], []>} : vector<8x16xbf16>, vector<16x8xbf16>, vector<8x8xf32> -> vector<8x8xf32>
    %98 = tpu.reciprocal %95 {approx = true} : vector<8x1xf32> -> vector<8x1xf32>
    %99 = vector.broadcast %98 : vector<8x1xf32> to vector<8x8xf32>
    %100 = arith.mulf %97, %99 : vector<8x8xf32>
    %c0_51 = arith.constant 0 : index
    %c0_52 = arith.constant 0 : index
    %c24_53 = arith.constant 24 : index
    %101 = vector.load %arg6[%c0_51, %c0_52, %c24_53] : memref<1x8x32xf32, #tpu.memory_space<vmem>>, vector<1x8x8xf32>
    %102 = vector.shape_cast %101 : vector<1x8x8xf32> to vector<8x8xf32>
    %103 = vector.shape_cast %100 : vector<8x8xf32> to vector<1x8x8xf32>
    tpu.vector_store %arg6[%c0_51, %c0_52, %c24_53], %103 {strides = array<i32>} : memref<1x8x32xf32, #tpu.memory_space<vmem>>, vector<1x8x8xf32>,
    return
  }
  func.func @transform_0(%arg0: i32, %arg1: i32) -> (i32, i32) {
    %c0_i32 = arith.constant 0 : i32
    %c0_i32_0 = arith.constant 0 : i32
    %c0_i32_1 = arith.constant 0 : i32
    return %c0_i32, %c0_i32_0 : i32, i32
  }
  func.func @transform_1(%arg0: i32, %arg1: i32) -> (i32, i32, i32) {
    %c0_i32 = arith.constant 0 : i32
    %c0_i32_0 = arith.constant 0 : i32
    %c0_i32_1 = arith.constant 0 : i32
    return %arg0, %c0_i32, %c0_i32_0 : i32, i32, i32
  }
  func.func @transform_2(%arg0: i32, %arg1: i32) -> (i32, i32, i32) {
    %c0_i32 = arith.constant 0 : i32
    %c0_i32_0 = arith.constant 0 : i32
    %c0_i32_1 = arith.constant 0 : i32
    %c0_i32_2 = arith.constant 0 : i32
    return %c0_i32, %c0_i32_0, %c0_i32_1 : i32, i32, i32
  }
  func.func @transform_3(%arg0: i32, %arg1: i32) -> (i32, i32, i32) {
    %c0_i32 = arith.constant 0 : i32
    %c0_i32_0 = arith.constant 0 : i32
    %c0_i32_1 = arith.constant 0 : i32
    %c0_i32_2 = arith.constant 0 : i32
    return %c0_i32, %c0_i32_0, %c0_i32_1 : i32, i32, i32
  }
  func.func @transform_4(%arg0: i32, %arg1: i32) -> (i32, i32, i32) {
    %c0_i32 = arith.constant 0 : i32
    %c0_i32_0 = arith.constant 0 : i32
    return %arg0, %arg1, %c0_i32 : i32, i32, i32
  }
}

</mosaic_0001>

<llo_original>
// kernel: tpu_custom_call.1
$region0: #{tpu_custom_call.1}
  #allocation0 [shape = 'u32[]', space=smem, size = 0x4, offset = 0x4, fixed_abs, tag = 'smem constant byte address 0x4 - core index']
  #allocation1 [shape = 'u32[144,128]{1,0:T(1,128)}', space=vmem, size = 0x12000, scoped, tag = 'internal scratch']
  #allocation2 [shape = 'bf16[16,32]{1,0:T(16,128)(2,1)}', space=vmem, size = 0x1000, scoped, tag = 'scratch operand']
  #allocation3 [shape = 'bf16[16,32]{1,0:T(16,128)(2,1)}', space=vmem, size = 0x1000, scoped, tag = 'scratch operand']
  %s0 = inlined_call_operand.hbm [shape: f32[4,16], index: 0, kind: input, shape index: {}]
  %s1 = inlined_call_operand.hbm [shape: bf16[2,16,32], index: 1, kind: input, shape index: {}]
  %s2 = inlined_call_operand.hbm [shape: bf16[3,32,32], index: 2, kind: input, shape index: {}]
  %s3 = inlined_call_operand.vmem [shape: f32[3,1,32], index: 3, kind: input, shape index: {}]
  %s4 = inlined_call_operand.hbm [shape: f32[2,16,32], index: 4, kind: output, shape index: {}]
  %s5 = sld [smem:[#allocation0]]
  $region65: #{tpu_custom_call.1} parent=0
    _
  %s7 = ssub.s32 1, %s5
  %s8 = scalar_select 0, %s7, %s5
  $region1: #{tpu_custom_call.1} parent=0
    #allocation4 [shape = 'u8[2048]{0}', space=vmem, size = 0x800, scoped, tag = 'input window, operand 0, single buffered']
    #allocation5 [shape = 's32[2]{0}', space=sflag, size = 0x8, scoped, tag = 'scoped memory for tpu_custom_call.1']
    #allocation6 [shape = 's32[2]{0}', space=sflag, size = 0x8, scoped, tag = 'scoped memory for tpu_custom_call.1']
    #allocation7 [shape = 'u8[8192]{0}', space=vmem, size = 0x2000, scoped, tag = 'input window, operand 1']
    #allocation8 [shape = 's32[2]{0}', space=sflag, size = 0x8, scoped, tag = 'scoped memory for tpu_custom_call.1']
    #allocation9 [shape = 'u8[24576]{0}', space=vmem, size = 0x6000, scoped, tag = 'input window, operand 2, single buffered']
    #allocation10 [shape = 'u8[8192]{0}', space=vmem, size = 0x2000, scoped, tag = 'output window, operand 0']
    %9 = vsyncpa [#allocation5], 0
    %10 = vsyncpa [#allocation8], 0
    %s11 = scalar_lea.sflag [#allocation8], 1
    %12 = vsyncpa %s11, 0
    %13 = vsyncpa [#allocation6], 0
    %s14 = scalar_lea.sflag [#allocation6], 1
    %15 = vsyncpa %s14, 0
    loop: start=0, step=1, limit=6
    $region2: #{tpu_custom_call.1} parent=1 // loop_pre_header
      _
    $region3: #{tpu_custom_call.1} parent=1 // loop_header
      %s17 = sphi 0, %s21
      %p18 = scmp.ge.s32.totalorder %s17, 6
      %s24 = sphi 0, %s36
      %s25 = sphi 0, %s32
      %s26 = sphi 0, %s24
      %s27 = sphi 0, %s25
      %s28 = sphi 0, %s26
      %s29 = sphi 0, %s27
      %s37 = sphi 0, %s37
      %s39 = sphi 0, %s37
      %s40 = sphi 0, %s39
      %s54 = sphi 0, %s40
      %s60 = sphi 0, %s62
      %s63 = sphi 0, %s60
      %s64 = sphi 0, %s63
      %s80 = sphi 0, %s64
      %s84 = sphi 0, %s84
      %s86 = sphi 0, %s84
      %s87 = sphi 0, %s86
      %s101 = sphi 0, %s87
      %s105 = sphi 0, %s105
      %s107 = sphi 0, %s105
      %s108 = sphi 0, %s107
      %s122 = sphi 0, %s108
      %s130 = sphi 0, %s132
      %s133 = sphi 0, %s130
      %s134 = sphi 0, %s133
      %s150 = sphi 0, %s134
    $region4: #{tpu_custom_call.1} parent=1 // loop_header_branch
      %20 = sbr.rel (%p18) target = $region8
    $region5: #{tpu_custom_call.1} parent=1 // loop_body
      %s22 = ssub.s32 %s17, 1
      %s23 = ssub.s32 %s17, 2
      %s30 = sadd.s32 1, %s25
      %p31 = scmp.ge.s32.totalorder %s30, 2
      %s32 = scalar_select %p31, 0, %s30
      %s33 = sadd.s32 1, %s24
      %s34 = scalar_select %p31, %s33, %s24
      %p35 = scmp.ge.s32.totalorder %s34, 2
      %s36 = scalar_select %p35, 0, %s34
      %s38 = sadd.s32 %s37, 1
      %p41 = scmp.eq.s32.totalorder %s17, 3
      %p42 = scmp.ne.s32.totalorder %s37, %s39
      %p43 = scmp.eq.s32.totalorder %s17, 0
      %p44 = por %p42, %p43
      %p45 = scmp.ne.s32.totalorder %s37, %s39
      %p46 = scmp.eq.s32.totalorder %s22, 3
      %p47 = por %p45, %p46
      %p48 = scmp.ne.s32.totalorder %s39, %s40
      %p49 = scmp.eq.s32.totalorder %s22, 0
      %p50 = por %p48, %p49
      %p51 = scmp.ne.s32.totalorder %s39, %s40
      %p52 = scmp.eq.s32.totalorder %s23, 3
      %p53 = por %p51, %p52
      %p55 = scmp.ne.s32.totalorder %s40, %s54
      %p56 = scmp.eq.s32.totalorder %s23, 0
      %p57 = por %p55, %p56
      %s58 = ssub.s32 %s24, %s36
      %p59 = scmp.eq.s32.totalorder %s58, 0
      %s61 = sadd.s32 %s60, 1
      %s62 = scalar_select %p59, %s60, %s61
      %p65 = pneg %p59
      %p66 = scmp.eq.s32.totalorder %s17, 3
      %p67 = por %p65, %p66
      %p68 = scmp.ne.s32.totalorder %s60, %s63
      %p69 = scmp.eq.s32.totalorder %s17, 0
      %p70 = por %p68, %p69
      %p71 = scmp.ne.s32.totalorder %s60, %s63
      %p72 = scmp.eq.s32.totalorder %s22, 3
      %p73 = por %p71, %p72
      %p74 = scmp.ne.s32.totalorder %s63, %s64
      %p75 = scmp.eq.s32.totalorder %s22, 0
      %p76 = por %p74, %p75
      %p77 = scmp.ne.s32.totalorder %s63, %s64
      %p78 = scmp.eq.s32.totalorder %s23, 3
      %p79 = por %p77, %p78
      %p81 = scmp.ne.s32.totalorder %s64, %s80
      %p82 = scmp.eq.s32.totalorder %s23, 0
      %p83 = por %p81, %p82
      %s85 = sadd.s32 %s84, 1
      %p88 = scmp.eq.s32.totalorder %s17, 3
      %p89 = scmp.ne.s32.totalorder %s84, %s86
      %p90 = scmp.eq.s32.totalorder %s17, 0
      %p91 = por %p89, %p90
      %p92 = scmp.ne.s32.totalorder %s84, %s86
      %p93 = scmp.eq.s32.totalorder %s22, 3
      %p94 = por %p92, %p93
      %p95 = scmp.ne.s32.totalorder %s86, %s87
      %p96 = scmp.eq.s32.totalorder %s22, 0
      %p97 = por %p95, %p96
      %p98 = scmp.ne.s32.totalorder %s86, %s87
      %p99 = scmp.eq.s32.totalorder %s23, 3
      %p100 = por %p98, %p99
      %p102 = scmp.ne.s32.totalorder %s87, %s101
      %p103 = scmp.eq.s32.totalorder %s23, 0
      %p104 = por %p102, %p103
      %s106 = sadd.s32 %s105, 1
      %p109 = scmp.eq.s32.totalorder %s17, 3
      %p110 = scmp.ne.s32.totalorder %s105, %s107
      %p111 = scmp.eq.s32.totalorder %s17, 0
      %p112 = por %p110, %p111
      %p113 = scmp.ne.s32.totalorder %s105, %s107
      %p114 = scmp.eq.s32.totalorder %s22, 3
      %p115 = por %p113, %p114
      %p116 = scmp.ne.s32.totalorder %s107, %s108
      %p117 = scmp.eq.s32.totalorder %s22, 0
      %p118 = por %p116, %p117
      %p119 = scmp.ne.s32.totalorder %s107, %s108
      %p120 = scmp.eq.s32.totalorder %s23, 3
      %p121 = por %p119, %p120
      %p123 = scmp.ne.s32.totalorder %s108, %s122
      %p124 = scmp.eq.s32.totalorder %s23, 0
      %p125 = por %p123, %p124
      %s126 = ssub.s32 %s24, %s36
      %s127 = ssub.s32 %s25, %s32
      %s128 = sor.u32 %s126, %s127
      %p129 = scmp.eq.s32.totalorder %s128, 0
      %s131 = sadd.s32 %s130, 1
      %s132 = scalar_select %p129, %s130, %s131
      %p135 = pneg %p129
      %p136 = scmp.eq.s32.totalorder %s17, 3
      %p137 = por %p135, %p136
      %p138 = scmp.ne.s32.totalorder %s130, %s133
      %p139 = scmp.eq.s32.totalorder %s17, 0
      %p140 = por %p138, %p139
      %p141 = scmp.ne.s32.totalorder %s130, %s133
      %p142 = scmp.eq.s32.totalorder %s22, 3
      %p143 = por %p141, %p142
      %p144 = scmp.ne.s32.totalorder %s133, %s134
      %p145 = scmp.eq.s32.totalorder %s22, 0
      %p146 = por %p144, %p145
      %p147 = scmp.ne.s32.totalorder %s133, %s134
      %p148 = scmp.eq.s32.totalorder %s23, 3
      %p149 = por %p147, %p148
      %p151 = scmp.ne.s32.totalorder %s134, %s150
      %p152 = scmp.eq.s32.totalorder %s23, 0
      %p153 = por %p151, %p152
      %p154 = scmp.le.s32.totalorder 1, %s17
      %p155 = scmp.lt.s32.totalorder %s17, 5
      %p156 = pnand %p154, %p155
      %p157 = pneg %p156
      // Predicated region
      $region9: #{tpu_custom_call.1} parent=5 // pred_check
        _
      $region10: #{tpu_custom_call.1} parent=5 // pred_check_branch
        %159 = sbr.rel (%p156) target = $region12
      $region11: #{tpu_custom_call.1} parent=5 // pred_region
        %s160 = ssub.s32 %s17, 1
        // Predicated region
        $region13: #{tpu_custom_call.1} parent=11 // pred_check
          %p161 = pneg %p50
        $region14: #{tpu_custom_call.1} parent=11 // pred_check_branch
          %163 = sbr.rel (%p161) target = $region16
        $region15: #{tpu_custom_call.1} parent=11 // pred_region
          %s165 = ssub.s32 64, 64
          %166 = vsyncadd [#allocation5], %s165
          %s168 = sshll.u32 [#allocation4], 4
          %s169 = int_to_ptr.vmem [resolvable:$true] %s168
          %171 = dma.hbm_to_vmem [thread:$0]  %s0, 64, %s169, [#allocation5]
        $region16: #{tpu_custom_call.1} parent=11 // pred_fallthru
          _
        // Predicated region
        $region17: #{tpu_custom_call.1} parent=11 // pred_check
          %p172 = pneg %p97
        $region18: #{tpu_custom_call.1} parent=11 // pred_check_branch
          %174 = sbr.rel (%p172) target = $region20
        $region19: #{tpu_custom_call.1} parent=11 // pred_region
          %s176 = ssub.s32 768, 768
          %177 = vsyncadd [#allocation8], %s176
          %s178 = sshll.u32 [#allocation9], 4
          %s179 = int_to_ptr.vmem [resolvable:$true] %s178
          %184 = dma.hbm_to_vmem [thread:$0]  %s2, 768, %s179, [#allocation8], 64, 64, 4
        $region20: #{tpu_custom_call.1} parent=11 // pred_fallthru
          _
        // Predicated region
        $region21: #{tpu_custom_call.1} parent=11 // pred_check
          %p185 = pneg %p118
        $region22: #{tpu_custom_call.1} parent=11 // pred_check_branch
          %187 = sbr.rel (%p185) target = $region24
        $region23: #{tpu_custom_call.1} parent=11 // pred_region
          _
        $region24: #{tpu_custom_call.1} parent=11 // pred_fallthru
          _
      $region12: #{tpu_custom_call.1} parent=5 // pred_fallthru
        _
      %p188 = scmp.lt.s32.totalorder %s17, 4
      // Predicated region
      $region25: #{tpu_custom_call.1} parent=5 // pred_check
        %p189 = pneg %p188
      $region26: #{tpu_custom_call.1} parent=5 // pred_check_branch
        %191 = sbr.rel (%p189) target = $region28
      $region27: #{tpu_custom_call.1} parent=5 // pred_region
        // Predicated region
        $region29: #{tpu_custom_call.1} parent=27 // pred_check
          %p192 = pneg %p70
        $region30: #{tpu_custom_call.1} parent=27 // pred_check_branch
          %194 = sbr.rel (%p192) target = $region32
        $region31: #{tpu_custom_call.1} parent=27 // pred_region
          %s195 = sand.u32 %s17, 1
          %s196 = scalar_lea.sflag [#allocation8], %s195
          %s197 = sand.u32 %s60, 1
          %s198 = smul.addr %s197, 8
          %s199 = scalar_lea.vmem [#allocation7], %s198
          %s201 = ssub.s32 128, 128
          %202 = vsyncadd %s196, %s201
          %s203 = smul.addr %s24, 2
          %s204 = smul.addr %s203, 64
          %s205 = scalar_lea.hbm %s1, %s204
          %s206 = sshll.u32 %s199, 4
          %s207 = int_to_ptr.vmem [resolvable:$true] %s206
          %212 = dma.hbm_to_vmem [thread:$0]  %s205, 128, %s207, %s196, 64, 64, 4
        $region32: #{tpu_custom_call.1} parent=27 // pred_fallthru
          _
      $region28: #{tpu_custom_call.1} parent=5 // pred_fallthru
        _
      %p213 = scmp.le.s32.totalorder 1, %s17
      %p214 = scmp.lt.s32.totalorder %s17, 5
      %p215 = pnand %p213, %p214
      %p216 = pneg %p215
      // Predicated region
      $region33: #{tpu_custom_call.1} parent=5 // pred_check
        _
      $region34: #{tpu_custom_call.1} parent=5 // pred_check_branch
        %218 = sbr.rel (%p215) target = $region36
      $region35: #{tpu_custom_call.1} parent=5 // pred_region
        %s219 = ssub.s32 %s17, 1
        // Predicated region
        $region37: #{tpu_custom_call.1} parent=35 // pred_check
          %p220 = pneg %p50
        $region38: #{tpu_custom_call.1} parent=35 // pred_check_branch
          %222 = sbr.rel (%p220) target = $region40
        $region39: #{tpu_custom_call.1} parent=35 // pred_region
          %223 = dma.done [#allocation5], 64
        $region40: #{tpu_custom_call.1} parent=35 // pred_fallthru
          _
        %s224 = sand.u32 %s22, 1
        %s225 = scalar_lea.sflag [#allocation8], %s224
        %s226 = sand.u32 %s63, 1
        %s227 = smul.addr %s226, 8
        %s228 = scalar_lea.vmem [#allocation7], %s227
        // Predicated region
        $region41: #{tpu_custom_call.1} parent=35 // pred_check
          %p229 = pneg %p76
        $region42: #{tpu_custom_call.1} parent=35 // pred_check_branch
          %231 = sbr.rel (%p229) target = $region44
        $region43: #{tpu_custom_call.1} parent=35 // pred_region
          %232 = dma.done %s225, 128
        $region44: #{tpu_custom_call.1} parent=35 // pred_fallthru
          _
        // Predicated region
        $region45: #{tpu_custom_call.1} parent=35 // pred_check
          %p233 = pneg %p97
        $region46: #{tpu_custom_call.1} parent=35 // pred_check_branch
          %235 = sbr.rel (%p233) target = $region48
        $region47: #{tpu_custom_call.1} parent=35 // pred_region
          %236 = dma.done [#allocation8], 768
        $region48: #{tpu_custom_call.1} parent=35 // pred_fallthru
          _
        %p237 = pneg %p50
        %p238 = pneg %p47
        %s239 = sand.u32 %s22, 1
        %s240 = scalar_lea.sflag [#allocation8], %s239
        %s241 = sand.u32 %s63, 1
        %s242 = smul.addr %s241, 8
        %s243 = scalar_lea.vmem [#allocation7], %s242
        %p244 = pneg %p76
        %p245 = pneg %p73
        %p246 = pneg %p97
        %p247 = pneg %p94
        %p248 = pneg %p118
        %p249 = pneg %p115
        %p250 = pneg %p146
        %p251 = pneg %p143
        %s252 = sand.u32 %s133, 1
        %s253 = scalar_lea.sflag [#allocation6], %s252
        %s254 = sand.u32 %s133, 1
        %s255 = smul.addr %s254, 8
        %s256 = scalar_lea.vmem [#allocation10], %s255
        %p258 = scmp.eq.s32.totalorder %s27, 0
        // Predicated region
        $region49: #{tpu_custom_call.1} parent=35 // pred_check
          %p259 = pneg %p258
        $region50: #{tpu_custom_call.1} parent=35 // pred_check_branch
          %261 = sbr.rel (%p259) target = $region52
        $region51: #{tpu_custom_call.1} parent=35 // pred_region
          %v262 = vld [vmem:[%s228] sm:$0xf]
          %v263 = vld [vmem:[%s228 + $0x4] sm:$0xf]
          %s264 = scalar_lea.vmem [#allocation9], 16
          %v265 = vld [vmem:[%s264] sm:$0xf]
          %v266 = vld [vmem:[%s264 + $0x4] sm:$0xf]
          %v267 = vld [vmem:[%s264 + $0x8] sm:$0xf]
          %v268 = vld [vmem:[%s264 + $0xc] sm:$0xf]
          %s269 = scalar_lea.vmem %s3, 1
          %v270 = vld [vmem:[%s269] sm:$0x1]
          %v272 = vlaneseq
          %v273 = vshrl.u32 %v272, 7
          %v274 = vsub.s32 0, %v273
          %v275 = vrot.slane %v270, %v274
          %v279 = vunpack.c.l.b16 %v262
          %v280 = vunpack.c.l.b16 %v263
          %v281 = vpack.c.b16 %v280, %v279
          %v286 = vunpack.c.l.b16 %v265
          %v287 = vunpack.c.l.b16 %v266
          %v288 = vunpack.c.l.b16 %v267
          %v289 = vunpack.c.l.b16 %v268
          %v290 = vpack.c.b16 %v287, %v286
          %v291 = vpack.c.b16 %v289, %v288
          %vm294 = vcmask 261120
          %v296 = vsel %vm294, %v281, 0
          %298 = vmatprep.subr.bf16.mxu0 0
          %299 = vmatpush1.bf16.msra.mxu0 %v290
          %300 = vmatprep.subr.bf16.mxu0 0
          %301 = vmatpush1.bf16.msra.mxu0 %v291
          %302 = vmatprep.subr.bf16.mxu0 0
          %303 = vmatpush1.bf16.msra.mxu0 0
          %304 = vmatprep.subr.bf16.mxu0 0
          %305 = vmatpush1.bf16.msra.mxu0 0
          %306 = vmatprep.subr.bf16.mxu0 0
          %307 = vmatpush1.bf16.msra.mxu0 0
          %308 = vmatprep.subr.bf16.mxu0 0
          %309 = vmatpush1.bf16.msra.mxu0 0
          %310 = vmatprep.subr.bf16.mxu0 0
          %311 = vmatpush1.bf16.msra.mxu0 0
          %312 = vmatprep.subr.bf16.mxu0 0
          %313 = vmatpush1.bf16.msra.mxu0 0
          %314 = vmatprep.subr.bf16.mxu0 0
          %315 = vmatpush1.bf16.msra.mxu0 0
          %316 = vmatprep.subr.bf16.mxu0 0
          %317 = vmatpush1.bf16.msra.mxu0 0
          %318 = vmatprep.subr.bf16.mxu0 0
          %319 = vmatpush1.bf16.msra.mxu0 0
          %320 = vmatprep.subr.bf16.mxu0 0
          %321 = vmatpush1.bf16.msra.mxu0 0
          %322 = vmatprep.subr.bf16.mxu0 0
          %323 = vmatpush1.bf16.msra.mxu0 0
          %324 = vmatprep.subr.bf16.mxu0 0
          %325 = vmatpush1.bf16.msra.mxu0 0
          %326 = vmatprep.subr.bf16.mxu0 0
          %327 = vmatpush1.bf16.msra.mxu0 0
          %328 = vmatprep.subr.bf16.mxu0 0
          %329 = vmatpush1.bf16.msra.mxu0 0
          %330 = vmatprep.mubr.bf16.mxu0 0
          %331 = vmatmul.mubr.bf16.gmra.mrb[0].mxu0 %v296
          %v332 = vpop.f32.mrb[0].mxu0
          %v333 = vadd.f32 %v275, %v332
          %v334 = vpop.f32.mrb[0].mxu0
          %v335 = vpop.f32.mrb[0].mxu0
          %v336 = vadd.f32 %v275, %v335
          %v337 = vpop.f32.mrb[0].mxu0
          %338 = vdwg.mxu0
          %s339 = scalar_lea.vmem [#allocation9], 32
          %v340 = vld [vmem:[%s339] sm:$0xf]
          %v341 = vld [vmem:[%s339 + $0x4] sm:$0xf]
          %v342 = vld [vmem:[%s339 + $0x8] sm:$0xf]
          %v343 = vld [vmem:[%s339 + $0xc] sm:$0xf]
          %s344 = scalar_lea.vmem %s3, 2
          %v345 = vld [vmem:[%s344] sm:$0x1]
          %v347 = vlaneseq
          %v348 = vshrl.u32 %v347, 7
          %v349 = vsub.s32 0, %v348
          %v350 = vrot.slane %v345, %v349
          %v356 = vunpack.c.l.b16 %v340
          %v357 = vunpack.c.l.b16 %v341
          %v358 = vunpack.c.l.b16 %v342
          %v359 = vunpack.c.l.b16 %v343
          %v360 = vpack.c.b16 %v357, %v356
          %v361 = vpack.c.b16 %v359, %v358
          %364 = vmatprep.subr.bf16.mxu0 0
          %365 = vmatpush1.bf16.msra.mxu0 %v360
          %366 = vmatprep.subr.bf16.mxu0 0
          %367 = vmatpush1.bf16.msra.mxu0 %v361
          %368 = vmatprep.subr.bf16.mxu0 0
          %369 = vmatpush1.bf16.msra.mxu0 0
          %370 = vmatprep.subr.bf16.mxu0 0
          %371 = vmatpush1.bf16.msra.mxu0 0
          %372 = vmatprep.subr.bf16.mxu0 0
          %373 = vmatpush1.bf16.msra.mxu0 0
          %374 = vmatprep.subr.bf16.mxu0 0
          %375 = vmatpush1.bf16.msra.mxu0 0
          %376 = vmatprep.subr.bf16.mxu0 0
          %377 = vmatpush1.bf16.msra.mxu0 0
          %378 = vmatprep.subr.bf16.mxu0 0
          %379 = vmatpush1.bf16.msra.mxu0 0
          %380 = vmatprep.subr.bf16.mxu0 0
          %381 = vmatpush1.bf16.msra.mxu0 0
          %382 = vmatprep.subr.bf16.mxu0 0
          %383 = vmatpush1.bf16.msra.mxu0 0
          %384 = vmatprep.subr.bf16.mxu0 0
          %385 = vmatpush1.bf16.msra.mxu0 0
          %386 = vmatprep.subr.bf16.mxu0 0
          %387 = vmatpush1.bf16.msra.mxu0 0
          %388 = vmatprep.subr.bf16.mxu0 0
          %389 = vmatpush1.bf16.msra.mxu0 0
          %390 = vmatprep.subr.bf16.mxu0 0
          %391 = vmatpush1.bf16.msra.mxu0 0
          %392 = vmatprep.subr.bf16.mxu0 0
          %393 = vmatpush1.bf16.msra.mxu0 0
          %394 = vmatprep.subr.bf16.mxu0 0
          %395 = vmatpush1.bf16.msra.mxu0 0
          %396 = vmatprep.mubr.bf16.mxu0 0
          %397 = vmatmul.mubr.bf16.gmra.mrb[0].mxu0 %v296
          %v398 = vpop.f32.mrb[0].mxu0
          %v399 = vadd.f32 %v350, %v398
          %v400 = vpop.f32.mrb[0].mxu0
          %v401 = vpop.f32.mrb[0].mxu0
          %v402 = vadd.f32 %v350, %v401
          %v403 = vpop.f32.mrb[0].mxu0
          %404 = vdwg.mxu0
          %v405 = vpack.c.bf16 %v336, %v333
          %406 = vst.msk [vmem:[#allocation2] sm:$0xff] %vm294, %v405
          %v407 = vpack.c.bf16 %v402, %v399
          %408 = vst.msk [vmem:[#allocation3] sm:$0xff] %vm294, %v407
        $region52: #{tpu_custom_call.1} parent=35 // pred_fallthru
          _
        %s409 = smul.u32 %s27, 8
        %s410 = sshra.s32 %s409, 3
        %s411 = sand.u32 %s409, 7
        %s412 = smul.addr %s410, 4
        %s413 = scalar_lea.vmem %s228, %s412 [#allocation7]
        %v414 = vld [vmem:[%s413] sm:$0xf]
        %v415 = vld [vmem:[#allocation9] sm:$0xf]
        %v416 = vld [vmem:[#allocation9 + $0x4] sm:$0xf]
        %v417 = vld [vmem:[#allocation9 + $0x8] sm:$0xf]
        %v418 = vld [vmem:[#allocation9 + $0xc] sm:$0xf]
        %v419 = vld [vmem:[%s3] sm:$0x1]
        %v421 = vlaneseq
        %v422 = vshrl.u32 %v421, 7
        %v423 = vsub.s32 0, %v422
        %v424 = vrot.slane %v419, %v423
        %v430 = vunpack.c.l.b16 %v415
        %v431 = vunpack.c.l.b16 %v416
        %v432 = vunpack.c.l.b16 %v417
        %v433 = vunpack.c.l.b16 %v418
        %v434 = vpack.c.b16 %v431, %v430
        %v435 = vpack.c.b16 %v433, %v432
        %vm438 = vcmask 261120
        %v440 = vsel %vm438, %v414, 0
        %442 = vmatprep.subr.bf16.mxu0 0
        %443 = vmatpush1.bf16.msra.mxu0 %v434
        %444 = vmatprep.subr.bf16.mxu0 0
        %445 = vmatpush1.bf16.msra.mxu0 %v435
        %446 = vmatprep.subr.bf16.mxu0 0
        %447 = vmatpush1.bf16.msra.mxu0 0
        %448 = vmatprep.subr.bf16.mxu0 0
        %449 = vmatpush1.bf16.msra.mxu0 0
        %450 = vmatprep.subr.bf16.mxu0 0
        %451 = vmatpush1.bf16.msra.mxu0 0
        %452 = vmatprep.subr.bf16.mxu0 0
        %453 = vmatpush1.bf16.msra.mxu0 0
        %454 = vmatprep.subr.bf16.mxu0 0
        %455 = vmatpush1.bf16.msra.mxu0 0
        %456 = vmatprep.subr.bf16.mxu0 0
        %457 = vmatpush1.bf16.msra.mxu0 0
        %458 = vmatprep.subr.bf16.mxu0 0
        %459 = vmatpush1.bf16.msra.mxu0 0
        %460 = vmatprep.subr.bf16.mxu0 0
        %461 = vmatpush1.bf16.msra.mxu0 0
        %462 = vmatprep.subr.bf16.mxu0 0
        %463 = vmatpush1.bf16.msra.mxu0 0
        %464 = vmatprep.subr.bf16.mxu0 0
        %465 = vmatpush1.bf16.msra.mxu0 0
        %466 = vmatprep.subr.bf16.mxu0 0
        %467 = vmatpush1.bf16.msra.mxu0 0
        %468 = vmatprep.subr.bf16.mxu0 0
        %469 = vmatpush1.bf16.msra.mxu0 0
        %470 = vmatprep.subr.bf16.mxu0 0
        %471 = vmatpush1.bf16.msra.mxu0 0
        %472 = vmatprep.subr.bf16.mxu0 0
        %473 = vmatpush1.bf16.msra.mxu0 0
        %474 = vmatprep.mubr.bf16.mxu0 0
        %475 = vmatmul.mubr.bf16.gmra.mrb[0].mxu0 %v440
        %v476 = vpop.f32.mrb[0].mxu0
        %v477 = vadd.f32 %v424, %v476
        %v478 = vpop.f32.mrb[0].mxu0
        %v479 = vpop.f32.mrb[0].mxu0
        %v480 = vpop.f32.mrb[0].mxu0
        %481 = vdwg.mxu0
        %v482 = vpack.c.bf16 %v477, %v477
        %v483 = vld [vmem:[#allocation2] sm:$0xff]
        %v484 = vld [vmem:[#allocation3] sm:$0xff]
        %v485 = vld [vmem:[#allocation4] sm:$0x1]
        %v486 = vlaneseq
        %v487 = vshrl.u32 %v486, 7
        %v488 = vsub.s32 0, %v487
        %v489 = vrot.slane %v485, %v488
        %vm490 = vcmask 64512
        %v492 = vsel %vm490, %v482, 0
        %v495 = vsel %vm490, %v483, 0
        %497 = vmatprep.subr.bf16.mxu0 0
        %498 = vmatpush1.bf16.xpose.msra.mxu0 %v495
        %499 = vmatprep.subr.bf16.mxu0 0
        %500 = vmatpush1.bf16.xpose.msra.mxu0 0
        %501 = vmatprep.subr.bf16.mxu0 0
        %502 = vmatpush1.bf16.xpose.msra.mxu0 0
        %503 = vmatprep.subr.bf16.mxu0 0
        %504 = vmatpush1.bf16.xpose.msra.mxu0 0
        %505 = vmatprep.subr.bf16.mxu0 0
        %506 = vmatpush1.bf16.xpose.msra.mxu0 0
        %507 = vmatprep.subr.bf16.mxu0 0
        %508 = vmatpush1.bf16.xpose.msra.mxu0 0
        %509 = vmatprep.subr.bf16.mxu0 0
        %510 = vmatpush1.bf16.xpose.msra.mxu0 0
        %511 = vmatprep.subr.bf16.mxu0 0
        %512 = vmatpush1.bf16.xpose.msra.mxu0 0
        %513 = vmatprep.subr.bf16.mxu0 0
        %514 = vmatpush1.bf16.xpose.msra.mxu0 0
        %515 = vmatprep.subr.bf16.mxu0 0
        %516 = vmatpush1.bf16.xpose.msra.mxu0 0
        %517 = vmatprep.subr.bf16.mxu0 0
        %518 = vmatpush1.bf16.xpose.msra.mxu0 0
        %519 = vmatprep.subr.bf16.mxu0 0
        %520 = vmatpush1.bf16.xpose.msra.mxu0 0
        %521 = vmatprep.subr.bf16.mxu0 0
        %522 = vmatpush1.bf16.xpose.msra.mxu0 0
        %523 = vmatprep.subr.bf16.mxu0 0
        %524 = vmatpush1.bf16.xpose.msra.mxu0 0
        %525 = vmatprep.subr.bf16.mxu0 0
        %526 = vmatpush1.bf16.xpose.msra.mxu0 0
        %527 = vmatprep.subr.bf16.mxu0 0
        %528 = vmatpush1.bf16.xpose.msra.mxu0 0
        %529 = vmatprep.mubr.bf16.mxu0 0
        %530 = vmatmul.mubr.bf16.gmra.mrb[0].mxu0 %v492
        %v531 = vpop.f32.mrb[0].mxu0
        %v532 = vadd.f32 %v489, %v531
        %v533 = vpop.f32.mrb[0].mxu0
        %v534 = vpop.f32.mrb[0].mxu0
        %v535 = vpop.f32.mrb[0].mxu0
        %536 = vdwg.mxu0
        %vm537 = vcmask 130048
        %v538 = vsel %vm537, %v532, -inf
        %539 = vmax.xlane.f32.xlu0 %v538
        %v540 = vpop.xlane.xlu0 %539
        %v541 = vsub.f32 %v532, %v540
        %v542 = vmul.f32 %v541, 1.442695
        %v543 = vpow.pop %v542
        %v544 = vsel %vm537, %v543, 0.0
        %545 = vadd.xlane.f32.xlu0 %v544
        %v546 = vpop.xlane.xlu0 %545
        %v547 = vpack.c.bf16 %v543, %v543
        %v549 = vsel %vm537, %v547, 0
        %551 = vmatprep.subr.bf16.mxu0 0
        %552 = vmatpush1.bf16.msra.mxu0 %v484
        %553 = vmatprep.subr.bf16.mxu0 0
        %554 = vmatpush1.bf16.msra.mxu0 0
        %555 = vmatprep.subr.bf16.mxu0 0
        %556 = vmatpush1.bf16.msra.mxu0 0
        %557 = vmatprep.subr.bf16.mxu0 0
        %558 = vmatpush1.bf16.msra.mxu0 0
        %559 = vmatprep.subr.bf16.mxu0 0
        %560 = vmatpush1.bf16.msra.mxu0 0
        %561 = vmatprep.subr.bf16.mxu0 0
        %562 = vmatpush1.bf16.msra.mxu0 0
        %563 = vmatprep.subr.bf16.mxu0 0
        %564 = vmatpush1.bf16.msra.mxu0 0
        %565 = vmatprep.subr.bf16.mxu0 0
        %566 = vmatpush1.bf16.msra.mxu0 0
        %567 = vmatprep.subr.bf16.mxu0 0
        %568 = vmatpush1.bf16.msra.mxu0 0
        %569 = vmatprep.subr.bf16.mxu0 0
        %570 = vmatpush1.bf16.msra.mxu0 0
        %571 = vmatprep.subr.bf16.mxu0 0
        %572 = vmatpush1.bf16.msra.mxu0 0
        %573 = vmatprep.subr.bf16.mxu0 0
        %574 = vmatpush1.bf16.msra.mxu0 0
        %575 = vmatprep.subr.bf16.mxu0 0
        %576 = vmatpush1.bf16.msra.mxu0 0
        %577 = vmatprep.subr.bf16.mxu0 0
        %578 = vmatpush1.bf16.msra.mxu0 0
        %579 = vmatprep.subr.bf16.mxu0 0
        %580 = vmatpush1.bf16.msra.mxu0 0
        %581 = vmatprep.subr.bf16.mxu0 0
        %582 = vmatpush1.bf16.msra.mxu0 0
        %583 = vmatprep.mubr.bf16.mxu0 0
        %584 = vmatmul.mubr.bf16.gmra.mrb[0].mxu0 %v549
        %v585 = vpop.f32.mrb[0].mxu0
        %v586 = vadd.f32 0.0, %v585
        %v587 = vpop.f32.mrb[0].mxu0
        %v588 = vpop.f32.mrb[0].mxu0
        %v589 = vpop.f32.mrb[0].mxu0
        %590 = vdwg.mxu0
        %v591 = vrcp.pop %v546
        %v592 = vmul.f32 %v586, %v591
        %593 = vst.msk [vmem:[%s256] sm:$0xff] %vm490, %v592
        %v594 = vld [vmem:[#allocation2] sm:$0xff]
        %v595 = vld [vmem:[#allocation3] sm:$0xff]
        %v596 = vld [vmem:[#allocation4 + $0x1] sm:$0x1]
        %v597 = vlaneseq
        %v598 = vshrl.u32 %v597, 7
        %v599 = vsub.s32 0, %v598
        %v600 = vrot.slane %v596, %v599
        %602 = vrot.lane.b32.xlu0 %v482, 120
        %v603 = vpop.permute.xlu0 %602
        %605 = vrot.lane.b32.xlu0 %v594, 120
        %v606 = vpop.permute.xlu0 %605
        %v608 = vsel %vm490, %v603, 0
        %v611 = vsel %vm490, %v606, 0
        %613 = vmatprep.subr.bf16.mxu0 0
        %614 = vmatpush1.bf16.xpose.msra.mxu0 %v611
        %615 = vmatprep.subr.bf16.mxu0 0
        %616 = vmatpush1.bf16.xpose.msra.mxu0 0
        %617 = vmatprep.subr.bf16.mxu0 0
        %618 = vmatpush1.bf16.xpose.msra.mxu0 0
        %619 = vmatprep.subr.bf16.mxu0 0
        %620 = vmatpush1.bf16.xpose.msra.mxu0 0
        %621 = vmatprep.subr.bf16.mxu0 0
        %622 = vmatpush1.bf16.xpose.msra.mxu0 0
        %623 = vmatprep.subr.bf16.mxu0 0
        %624 = vmatpush1.bf16.xpose.msra.mxu0 0
        %625 = vmatprep.subr.bf16.mxu0 0
        %626 = vmatpush1.bf16.xpose.msra.mxu0 0
        %627 = vmatprep.subr.bf16.mxu0 0
        %628 = vmatpush1.bf16.xpose.msra.mxu0 0
        %629 = vmatprep.subr.bf16.mxu0 0
        %630 = vmatpush1.bf16.xpose.msra.mxu0 0
        %631 = vmatprep.subr.bf16.mxu0 0
        %632 = vmatpush1.bf16.xpose.msra.mxu0 0
        %633 = vmatprep.subr.bf16.mxu0 0
        %634 = vmatpush1.bf16.xpose.msra.mxu0 0
        %635 = vmatprep.subr.bf16.mxu0 0
        %636 = vmatpush1.bf16.xpose.msra.mxu0 0
        %637 = vmatprep.subr.bf16.mxu0 0
        %638 = vmatpush1.bf16.xpose.msra.mxu0 0
        %639 = vmatprep.subr.bf16.mxu0 0
        %640 = vmatpush1.bf16.xpose.msra.mxu0 0
        %641 = vmatprep.subr.bf16.mxu0 0
        %642 = vmatpush1.bf16.xpose.msra.mxu0 0
        %643 = vmatprep.subr.bf16.mxu0 0
        %644 = vmatpush1.bf16.xpose.msra.mxu0 0
        %645 = vmatprep.mubr.bf16.mxu0 0
        %646 = vmatmul.mubr.bf16.gmra.mrb[0].mxu0 %v608
        %v647 = vpop.f32.mrb[0].mxu0
        %v648 = vadd.f32 %v600, %v647
        %v649 = vpop.f32.mrb[0].mxu0
        %v650 = vpop.f32.mrb[0].mxu0
        %v651 = vpop.f32.mrb[0].mxu0
        %652 = vdwg.mxu0
        %v653 = vsel %vm537, %v648, -inf
        %654 = vmax.xlane.f32.xlu0 %v653
        %v655 = vpop.xlane.xlu0 %654
        %v656 = vsub.f32 %v648, %v655
        %v657 = vmul.f32 %v656, 1.442695
        %v658 = vpow.pop %v657
        %v659 = vsel %vm537, %v658, 0.0
        %660 = vadd.xlane.f32.xlu0 %v659
        %v661 = vpop.xlane.xlu0 %660
        %v662 = vpack.c.bf16 %v658, %v658
        %664 = vrot.lane.b32.xlu0 %v595, 120
        %v665 = vpop.permute.xlu0 %664
        %v668 = vsel %vm537, %v662, 0
        %670 = vmatprep.subr.bf16.mxu0 0
        %671 = vmatpush1.bf16.msra.mxu0 %v665
        %672 = vmatprep.subr.bf16.mxu0 0
        %673 = vmatpush1.bf16.msra.mxu0 0
        %674 = vmatprep.subr.bf16.mxu0 0
        %675 = vmatpush1.bf16.msra.mxu0 0
        %676 = vmatprep.subr.bf16.mxu0 0
        %677 = vmatpush1.bf16.msra.mxu0 0
        %678 = vmatprep.subr.bf16.mxu0 0
        %679 = vmatpush1.bf16.msra.mxu0 0
        %680 = vmatprep.subr.bf16.mxu0 0
        %681 = vmatpush1.bf16.msra.mxu0 0
        %682 = vmatprep.subr.bf16.mxu0 0
        %683 = vmatpush1.bf16.msra.mxu0 0
        %684 = vmatprep.subr.bf16.mxu0 0
        %685 = vmatpush1.bf16.msra.mxu0 0
        %686 = vmatprep.subr.bf16.mxu0 0
        %687 = vmatpush1.bf16.msra.mxu0 0
        %688 = vmatprep.subr.bf16.mxu0 0
        %689 = vmatpush1.bf16.msra.mxu0 0
        %690 = vmatprep.subr.bf16.mxu0 0
        %691 = vmatpush1.bf16.msra.mxu0 0
        %692 = vmatprep.subr.bf16.mxu0 0
        %693 = vmatpush1.bf16.msra.mxu0 0
        %694 = vmatprep.subr.bf16.mxu0 0
        %695 = vmatpush1.bf16.msra.mxu0 0
        %696 = vmatprep.subr.bf16.mxu0 0
        %697 = vmatpush1.bf16.msra.mxu0 0
        %698 = vmatprep.subr.bf16.mxu0 0
        %699 = vmatpush1.bf16.msra.mxu0 0
        %700 = vmatprep.subr.bf16.mxu0 0
        %701 = vmatpush1.bf16.msra.mxu0 0
        %702 = vmatprep.mubr.bf16.mxu0 0
        %703 = vmatmul.mubr.bf16.gmra.mrb[0].mxu0 %v668
        %v704 = vpop.f32.mrb[0].mxu0
        %v705 = vadd.f32 0.0, %v704
        %v706 = vpop.f32.mrb[0].mxu0
        %v707 = vpop.f32.mrb[0].mxu0
        %v708 = vpop.f32.mrb[0].mxu0
        %709 = vdwg.mxu0
        %v710 = vrcp.pop %v661
        %v711 = vmul.f32 %v705, %v710
        %713 = vrot.lane.b32.xlu0 %v711, 8
        %v714 = vpop.permute.xlu0 %713
        %vm716 = vcmask 130112
        %717 = vst.msk [vmem:[%s256] sm:$0xff] %vm716, %v714
        %v718 = vld [vmem:[#allocation2] sm:$0xff]
        %v719 = vld [vmem:[#allocation3] sm:$0xff]
        %v720 = vld [vmem:[#allocation4 + $0x2] sm:$0x1]
        %v721 = vlaneseq
        %v722 = vshrl.u32 %v721, 7
        %v723 = vsub.s32 0, %v722
        %v724 = vrot.slane %v720, %v723
        %725 = vrot.lane.b32.xlu0 %v482, 112
        %v726 = vpop.permute.xlu0 %725
        %728 = vrot.lane.b32.xlu0 %v718, 112
        %v729 = vpop.permute.xlu0 %728
        %v731 = vsel %vm490, %v726, 0
        %v734 = vsel %vm490, %v729, 0
        %736 = vmatprep.subr.bf16.mxu0 0
        %737 = vmatpush1.bf16.xpose.msra.mxu0 %v734
        %738 = vmatprep.subr.bf16.mxu0 0
        %739 = vmatpush1.bf16.xpose.msra.mxu0 0
        %740 = vmatprep.subr.bf16.mxu0 0
        %741 = vmatpush1.bf16.xpose.msra.mxu0 0
        %742 = vmatprep.subr.bf16.mxu0 0
        %743 = vmatpush1.bf16.xpose.msra.mxu0 0
        %744 = vmatprep.subr.bf16.mxu0 0
        %745 = vmatpush1.bf16.xpose.msra.mxu0 0
        %746 = vmatprep.subr.bf16.mxu0 0
        %747 = vmatpush1.bf16.xpose.msra.mxu0 0
        %748 = vmatprep.subr.bf16.mxu0 0
        %749 = vmatpush1.bf16.xpose.msra.mxu0 0
        %750 = vmatprep.subr.bf16.mxu0 0
        %751 = vmatpush1.bf16.xpose.msra.mxu0 0
        %752 = vmatprep.subr.bf16.mxu0 0
        %753 = vmatpush1.bf16.xpose.msra.mxu0 0
        %754 = vmatprep.subr.bf16.mxu0 0
        %755 = vmatpush1.bf16.xpose.msra.mxu0 0
        %756 = vmatprep.subr.bf16.mxu0 0
        %757 = vmatpush1.bf16.xpose.msra.mxu0 0
        %758 = vmatprep.subr.bf16.mxu0 0
        %759 = vmatpush1.bf16.xpose.msra.mxu0 0
        %760 = vmatprep.subr.bf16.mxu0 0
        %761 = vmatpush1.bf16.xpose.msra.mxu0 0
        %762 = vmatprep.subr.bf16.mxu0 0
        %763 = vmatpush1.bf16.xpose.msra.mxu0 0
        %764 = vmatprep.subr.bf16.mxu0 0
        %765 = vmatpush1.bf16.xpose.msra.mxu0 0
        %766 = vmatprep.subr.bf16.mxu0 0
        %767 = vmatpush1.bf16.xpose.msra.mxu0 0
        %768 = vmatprep.mubr.bf16.mxu0 0
        %769 = vmatmul.mubr.bf16.gmra.mrb[0].mxu0 %v731
        %v770 = vpop.f32.mrb[0].mxu0
        %v771 = vadd.f32 %v724, %v770
        %v772 = vpop.f32.mrb[0].mxu0
        %v773 = vpop.f32.mrb[0].mxu0
        %v774 = vpop.f32.mrb[0].mxu0
        %775 = vdwg.mxu0
        %v776 = vsel %vm537, %v771, -inf
        %777 = vmax.xlane.f32.xlu0 %v776
        %v778 = vpop.xlane.xlu0 %777
        %v779 = vsub.f32 %v771, %v778
        %v780 = vmul.f32 %v779, 1.442695
        %v781 = vpow.pop %v780
        %v782 = vsel %vm537, %v781, 0.0
        %783 = vadd.xlane.f32.xlu0 %v782
        %v784 = vpop.xlane.xlu0 %783
        %v785 = vpack.c.bf16 %v781, %v781
        %787 = vrot.lane.b32.xlu0 %v719, 112
        %v788 = vpop.permute.xlu0 %787
        %v791 = vsel %vm537, %v785, 0
        %793 = vmatprep.subr.bf16.mxu0 0
        %794 = vmatpush1.bf16.msra.mxu0 %v788
        %795 = vmatprep.subr.bf16.mxu0 0
        %796 = vmatpush1.bf16.msra.mxu0 0
        %797 = vmatprep.subr.bf16.mxu0 0
        %798 = vmatpush1.bf16.msra.mxu0 0
        %799 = vmatprep.subr.bf16.mxu0 0
        %800 = vmatpush1.bf16.msra.mxu0 0
        %801 = vmatprep.subr.bf16.mxu0 0
        %802 = vmatpush1.bf16.msra.mxu0 0
        %803 = vmatprep.subr.bf16.mxu0 0
        %804 = vmatpush1.bf16.msra.mxu0 0
        %805 = vmatprep.subr.bf16.mxu0 0
        %806 = vmatpush1.bf16.msra.mxu0 0
        %807 = vmatprep.subr.bf16.mxu0 0
        %808 = vmatpush1.bf16.msra.mxu0 0
        %809 = vmatprep.subr.bf16.mxu0 0
        %810 = vmatpush1.bf16.msra.mxu0 0
        %811 = vmatprep.subr.bf16.mxu0 0
        %812 = vmatpush1.bf16.msra.mxu0 0
        %813 = vmatprep.subr.bf16.mxu0 0
        %814 = vmatpush1.bf16.msra.mxu0 0
        %815 = vmatprep.subr.bf16.mxu0 0
        %816 = vmatpush1.bf16.msra.mxu0 0
        %817 = vmatprep.subr.bf16.mxu0 0
        %818 = vmatpush1.bf16.msra.mxu0 0
        %819 = vmatprep.subr.bf16.mxu0 0
        %820 = vmatpush1.bf16.msra.mxu0 0
        %821 = vmatprep.subr.bf16.mxu0 0
        %822 = vmatpush1.bf16.msra.mxu0 0
        %823 = vmatprep.subr.bf16.mxu0 0
        %824 = vmatpush1.bf16.msra.mxu0 0
        %825 = vmatprep.mubr.bf16.mxu0 0
        %826 = vmatmul.mubr.bf16.gmra.mrb[0].mxu0 %v791
        %v827 = vpop.f32.mrb[0].mxu0
        %v828 = vadd.f32 0.0, %v827
        %v829 = vpop.f32.mrb[0].mxu0
        %v830 = vpop.f32.mrb[0].mxu0
        %v831 = vpop.f32.mrb[0].mxu0
        %832 = vdwg.mxu0
        %v833 = vrcp.pop %v784
        %v834 = vmul.f32 %v828, %v833
        %836 = vrot.lane.b32.xlu0 %v834, 16
        %v837 = vpop.permute.xlu0 %836
        %vm839 = vcmask 195712
        %840 = vst.msk [vmem:[%s256] sm:$0xff] %vm839, %v837
        %v841 = vld [vmem:[#allocation2] sm:$0xff]
        %v842 = vld [vmem:[#allocation3] sm:$0xff]
        %v843 = vld [vmem:[#allocation4 + $0x3] sm:$0x1]
        %v844 = vlaneseq
        %v845 = vshrl.u32 %v844, 7
        %v846 = vsub.s32 0, %v845
        %v847 = vrot.slane %v843, %v846
        %848 = vrot.lane.b32.xlu0 %v482, 104
        %v849 = vpop.permute.xlu0 %848
        %851 = vrot.lane.b32.xlu0 %v841, 104
        %v852 = vpop.permute.xlu0 %851
        %v854 = vsel %vm490, %v849, 0
        %v857 = vsel %vm490, %v852, 0
        %859 = vmatprep.subr.bf16.mxu0 0
        %860 = vmatpush1.bf16.xpose.msra.mxu0 %v857
        %861 = vmatprep.subr.bf16.mxu0 0
        %862 = vmatpush1.bf16.xpose.msra.mxu0 0
        %863 = vmatprep.subr.bf16.mxu0 0
        %864 = vmatpush1.bf16.xpose.msra.mxu0 0
        %865 = vmatprep.subr.bf16.mxu0 0
        %866 = vmatpush1.bf16.xpose.msra.mxu0 0
        %867 = vmatprep.subr.bf16.mxu0 0
        %868 = vmatpush1.bf16.xpose.msra.mxu0 0
        %869 = vmatprep.subr.bf16.mxu0 0
        %870 = vmatpush1.bf16.xpose.msra.mxu0 0
        %871 = vmatprep.subr.bf16.mxu0 0
        %872 = vmatpush1.bf16.xpose.msra.mxu0 0
        %873 = vmatprep.subr.bf16.mxu0 0
        %874 = vmatpush1.bf16.xpose.msra.mxu0 0
        %875 = vmatprep.subr.bf16.mxu0 0
        %876 = vmatpush1.bf16.xpose.msra.mxu0 0
        %877 = vmatprep.subr.bf16.mxu0 0
        %878 = vmatpush1.bf16.xpose.msra.mxu0 0
        %879 = vmatprep.subr.bf16.mxu0 0
        %880 = vmatpush1.bf16.xpose.msra.mxu0 0
        %881 = vmatprep.subr.bf16.mxu0 0
        %882 = vmatpush1.bf16.xpose.msra.mxu0 0
        %883 = vmatprep.subr.bf16.mxu0 0
        %884 = vmatpush1.bf16.xpose.msra.mxu0 0
        %885 = vmatprep.subr.bf16.mxu0 0
        %886 = vmatpush1.bf16.xpose.msra.mxu0 0
        %887 = vmatprep.subr.bf16.mxu0 0
        %888 = vmatpush1.bf16.xpose.msra.mxu0 0
        %889 = vmatprep.subr.bf16.mxu0 0
        %890 = vmatpush1.bf16.xpose.msra.mxu0 0
        %891 = vmatprep.mubr.bf16.mxu0 0
        %892 = vmatmul.mubr.bf16.gmra.mrb[0].mxu0 %v854
        %v893 = vpop.f32.mrb[0].mxu0
        %v894 = vadd.f32 %v847, %v893
        %v895 = vpop.f32.mrb[0].mxu0
        %v896 = vpop.f32.mrb[0].mxu0
        %v897 = vpop.f32.mrb[0].mxu0
        %898 = vdwg.mxu0
        %v899 = vsel %vm537, %v894, -inf
        %900 = vmax.xlane.f32.xlu0 %v899
        %v901 = vpop.xlane.xlu0 %900
        %v902 = vsub.f32 %v894, %v901
        %v903 = vmul.f32 %v902, 1.442695
        %v904 = vpow.pop %v903
        %v905 = vsel %vm537, %v904, 0.0
        %906 = vadd.xlane.f32.xlu0 %v905
        %v907 = vpop.xlane.xlu0 %906
        %v908 = vpack.c.bf16 %v904, %v904
        %910 = vrot.lane.b32.xlu0 %v842, 104
        %v911 = vpop.permute.xlu0 %910
        %v914 = vsel %vm537, %v908, 0
        %916 = vmatprep.subr.bf16.mxu0 0
        %917 = vmatpush1.bf16.msra.mxu0 %v911
        %918 = vmatprep.subr.bf16.mxu0 0
        %919 = vmatpush1.bf16.msra.mxu0 0
        %920 = vmatprep.subr.bf16.mxu0 0
        %921 = vmatpush1.bf16.msra.mxu0 0
        %922 = vmatprep.subr.bf16.mxu0 0
        %923 = vmatpush1.bf16.msra.mxu0 0
        %924 = vmatprep.subr.bf16.mxu0 0
        %925 = vmatpush1.bf16.msra.mxu0 0
        %926 = vmatprep.subr.bf16.mxu0 0
        %927 = vmatpush1.bf16.msra.mxu0 0
        %928 = vmatprep.subr.bf16.mxu0 0
        %929 = vmatpush1.bf16.msra.mxu0 0
        %930 = vmatprep.subr.bf16.mxu0 0
        %931 = vmatpush1.bf16.msra.mxu0 0
        %932 = vmatprep.subr.bf16.mxu0 0
        %933 = vmatpush1.bf16.msra.mxu0 0
        %934 = vmatprep.subr.bf16.mxu0 0
        %935 = vmatpush1.bf16.msra.mxu0 0
        %936 = vmatprep.subr.bf16.mxu0 0
        %937 = vmatpush1.bf16.msra.mxu0 0
        %938 = vmatprep.subr.bf16.mxu0 0
        %939 = vmatpush1.bf16.msra.mxu0 0
        %940 = vmatprep.subr.bf16.mxu0 0
        %941 = vmatpush1.bf16.msra.mxu0 0
        %942 = vmatprep.subr.bf16.mxu0 0
        %943 = vmatpush1.bf16.msra.mxu0 0
        %944 = vmatprep.subr.bf16.mxu0 0
        %945 = vmatpush1.bf16.msra.mxu0 0
        %946 = vmatprep.subr.bf16.mxu0 0
        %947 = vmatpush1.bf16.msra.mxu0 0
        %948 = vmatprep.mubr.bf16.mxu0 0
        %949 = vmatmul.mubr.bf16.gmra.mrb[0].mxu0 %v914
        %v950 = vpop.f32.mrb[0].mxu0
        %v951 = vadd.f32 0.0, %v950
        %v952 = vpop.f32.mrb[0].mxu0
        %v953 = vpop.f32.mrb[0].mxu0
        %v954 = vpop.f32.mrb[0].mxu0
        %955 = vdwg.mxu0
        %v956 = vrcp.pop %v907
        %v957 = vmul.f32 %v951, %v956
        %959 = vrot.lane.b32.xlu0 %v957, 24
        %v960 = vpop.permute.xlu0 %959
        %vm962 = vcmask 261312
        %963 = vst.msk [vmem:[%s256] sm:$0xff] %vm962, %v960
        %s964 = sand.u32 %s133, 1
        %s965 = scalar_lea.sflag [#allocation6], %s964
        %s966 = sand.u32 %s133, 1
        %s967 = smul.addr %s966, 8
        %s968 = scalar_lea.vmem [#allocation10], %s967
        // Predicated region
        $region53: #{tpu_custom_call.1} parent=35 // pred_check
          %p969 = pneg %p143
        $region54: #{tpu_custom_call.1} parent=35 // pred_check_branch
          %971 = sbr.rel (%p969) target = $region56
        $region55: #{tpu_custom_call.1} parent=35 // pred_region
          %s973 = ssub.s32 128, 128
          %974 = vsyncadd %s965, %s973
          %s975 = smul.addr %s26, 2
          %s976 = sadd.s32 %s27, %s975
          %s977 = smul.addr %s976, 128
          %s978 = scalar_lea.hbm %s4, %s977
          %s980 = sshll.u32 %s968, 4
          %s981 = int_to_ptr.vmem [resolvable:$true] %s980
          %983 = dma.vmem_to_hbm [thread:$0]  %s981, 128, %s978, %s965
        $region56: #{tpu_custom_call.1} parent=35 // pred_fallthru
          _
      $region36: #{tpu_custom_call.1} parent=5 // pred_fallthru
        _
      %p984 = scmp.le.s32.totalorder 2, %s17
      // Predicated region
      $region57: #{tpu_custom_call.1} parent=5 // pred_check
        %p985 = pneg %p984
      $region58: #{tpu_custom_call.1} parent=5 // pred_check_branch
        %987 = sbr.rel (%p985) target = $region60
      $region59: #{tpu_custom_call.1} parent=5 // pred_region
        %s988 = ssub.s32 %s17, 2
        // Predicated region
        $region61: #{tpu_custom_call.1} parent=59 // pred_check
          %p989 = pneg %p149
        $region62: #{tpu_custom_call.1} parent=59 // pred_check_branch
          %991 = sbr.rel (%p989) target = $region64
        $region63: #{tpu_custom_call.1} parent=59 // pred_region
          %s992 = sand.u32 %s134, 1
          %s993 = scalar_lea.sflag [#allocation6], %s992
          %s994 = sand.u32 %s134, 1
          %s995 = smul.addr %s994, 8
          %s996 = scalar_lea.vmem [#allocation10], %s995
          %997 = dma.done %s993, 128
        $region64: #{tpu_custom_call.1} parent=59 // pred_fallthru
          _
      $region60: #{tpu_custom_call.1} parent=5 // pred_fallthru
        _
    $region6: #{tpu_custom_call.1} parent=1 // loop_footer
      %s21 = sadd.s32 1, %s17
    $region7: #{tpu_custom_call.1} parent=1 // loop_footer_branch
      %16 = sbr.rel target = $region3
    $region8: #{tpu_custom_call.1} parent=1 // loop_exit
      _
    %998 = vsyncpa [#allocation5], 1
    %s999 = scalar_lea.sflag [#allocation5], 1
    %1000 = vsyncpa %s999, 1
    %1001 = vsyncpa [#allocation8], 1
    %s1002 = scalar_lea.sflag [#allocation8], 1
    %1003 = vsyncpa %s1002, 1
    %1004 = vsyncpa [#allocation6], 1
    %s1005 = scalar_lea.sflag [#allocation6], 1
    %1006 = vsyncpa %s1005, 1

</llo_original>
